<compile_context>
chip_gen: v5e
topology: v5e:2x2
jax: 0.10.0
libtpu: 0.0.40
codegen_flags: <defaults>
</compile_context>

<pallas_src>
import jax
import jax.numpy as jnp
from jax.experimental import pallas as pl
from jax.experimental.pallas import tpu as pltpu

NEG_SLOPE = 0.01   # nn.LeakyReLU default negative_slope
_LANE = 128
_SUBLANE = 8


def _cdiv(a, b):
    return -(-a // b)


def _round_up(x, m):
    return _cdiv(x, m) * m


def _vmem_capacity_bytes():
    """Per-core VMEM capacity from the chip; conservative fallback if unavailable."""
    try:
        cap = int(pltpu.get_tpu_info().vmem_capacity_bytes)
        if cap > 0:
            return cap
    except Exception:
        pass
    return 64 * 1024 * 1024   # v7x per-TC size: safe lower bound everywhere


# --------------------------------------------------------------------------------------
# Kernel
# --------------------------------------------------------------------------------------
def mlp_kernel(x_ref, w1_ref, b1_ref, w2_ref, b2_ref, o_ref, acc_ref):
    h_step = pl.program_id(1)

    @pl.when(h_step == 0)
    def _init():
        acc_ref[...] = jnp.zeros_like(acc_ref)

    # Linear 1 over this hidden chunk: [TB, indim_p] @ [indim_p, th] -> f32 on the MXU.
    h = jnp.dot(x_ref[...], w1_ref[...], preferred_element_type=jnp.float32)
    h = h + b1_ref[...]
    # Dropout(p=0.5): identity (eval mode).
    # LeakyReLU kept in f32 on the VPU.
    h = jnp.where(h >= 0, h, NEG_SLOPE * h)
    # Linear 2 partial sum over this hidden chunk; cast only at the dot boundary.
    acc_ref[...] += jnp.dot(h.astype(w2_ref.dtype), w2_ref[...],
                            preferred_element_type=jnp.float32)

    @pl.when(h_step == pl.num_programs(1) - 1)
    def _finish():
        o_ref[...] = (acc_ref[...] + b2_ref[...]).astype(o_ref.dtype)


# --------------------------------------------------------------------------------------
# Planning / parameter preparation (hoistable, one-time per weight set)
# --------------------------------------------------------------------------------------
def make_plan(indim, hdim, outdim, *, compute_dtype=jnp.bfloat16,
              out_dtype=jnp.float32, tb_max=512, hidden_tile=None):
    capacity = _vmem_capacity_bytes()
    budget = int(0.70 * capacity)        # working-set budget for tile sizing
    vmem_limit = int(0.85 * capacity)    # scoped VMEM limit handed to Mosaic

    compute_dtype = jnp.dtype(compute_dtype)
    out_dtype = jnp.dtype(out_dtype)
    w_bytes = compute_dtype.itemsize

    indim_p = _round_up(indim, _LANE)
    outdim_p = _round_up(outdim, _LANE)
    hdim_full = _round_up(hdim, _LANE)

    def weight_bytes(th, n_h):
        # Resident (constant index map) weights are single-buffered; tiled weights
        # need double-buffering for pipelining.
        nbuf = 1 if n_h == 1 else 2
        return (nbuf * (indim_p * th + th * outdim_p) * w_bytes
                + nbuf * th * 4            # b1 chunk (f32)
                + outdim_p * 4)            # b2 resident (f32)

    if hidden_tile is not None:
        th = min(_round_up(hidden_tile, _LANE), hdim_full)
    else:
        th = hdim_full
        while th > _LANE and weight_bytes(th, _round_up(hdim, th) // th) > 0.6 * budget:
            th = max(_LANE, _round_up(th // 2, _LANE))

    hdim_p = _round_up(hdim, th)   # padded hidden cols are zero -> contribute nothing
    n_h = hdim_p // th

    return dict(indim=indim, hdim=hdim, outdim=outdim,
                indim_p=indim_p, hdim_p=hdim_p, outdim_p=outdim_p,
                th=th, n_h=n_h,
                compute_dtype=compute_dtype, out_dtype=out_dtype,
                budget=budget, vmem_limit=vmem_limit,
                weight_vmem=weight_bytes(th, n_h), tb_max=tb_max)


def prepare_params(w1, b1, w2, b2, plan):
    """One-time padding + casting of the weights (hoisted out of the per-call path)."""
    cd = plan["compute_dtype"]
    indim, hdim, outdim = plan["indim"], plan["hdim"], plan["outdim"]
    indim_p, hdim_p, outdim_p = plan["indim_p"], plan["hdim_p"], plan["outdim_p"]
    w1_p = jnp.pad(w1.astype(cd), ((0, indim_p - indim), (0, hdim_p - hdim)))
    b1_p = jnp.pad(b1.astype(jnp.float32), (0, hdim_p - hdim)).reshape(1, hdim_p)
    w2_p = jnp.pad(w2.astype(cd), ((0, hdim_p - hdim), (0, outdim_p - outdim)))
    b2_p = jnp.pad(b2.astype(jnp.float32), (0, outdim_p - outdim)).reshape(1, outdim_p)
    return w1_p, b1_p, w2_p, b2_p


def _pick_batch_tile(B, plan):
    act_bytes = plan["compute_dtype"].itemsize
    out_bytes = plan["out_dtype"].itemsize
    sub = max(_SUBLANE, 32 // act_bytes)   # packed sublane count: 8 f32, 16 bf16, 32 int8
    indim_p, outdim_p, th = plan["indim_p"], plan["outdim_p"], plan["th"]
    avail = max(plan["budget"] - plan["weight_vmem"], 0)

    def tile_bytes(tb):
        return (2 * tb * indim_p * act_bytes      # double-buffered x tile
                + 2 * tb * outdim_p * out_bytes   # double-buffered out tile
                + tb * th * 4                     # f32 hidden chunk
                + tb * outdim_p * 4)              # f32 accumulator scratch

    tb = _round_up(min(plan["tb_max"], _round_up(B, sub)), sub)
    while tb > sub and tile_bytes(tb) > avail:
        tb = max(sub, _round_up(tb // 2, sub))
    # Ensure >= 2 batch grid steps so the "parallel" axis can shard across v7x's 2 TCs.
    if B >= 2 * sub:
        tb = min(tb, _round_up(_cdiv(B, 2), sub))
    return max(tb, sub)


# --------------------------------------------------------------------------------------
# Forward
# --------------------------------------------------------------------------------------
def mlp_forward(x, params_p, plan):
    B, indim = x.shape
    assert indim == plan["indim"]
    indim_p, outdim_p = plan["indim_p"], plan["outdim_p"]
    th, n_h = plan["th"], plan["n_h"]
    cd, out_dtype = plan["compute_dtype"], plan["out_dtype"]

    x = x.astype(cd)
    if indim_p != indim:
        # Feature pad only (zero columns contribute nothing); batch dim stays ragged.
        x = jnp.pad(x, ((0, 0), (0, indim_p - indim)))

    tb = _pick_batch_tile(B, plan)
    grid = (_cdiv(B, tb), n_h)

    # Resident (constant index map) operands: single-buffer to halve their VMEM cost.
    resident = pl.Buffered(1) if n_h == 1 else None

    w1_p, b1_p, w2_p, b2_p = params_p

    out_p = pl.pallas_call(
        mlp_kernel,
        out_shape=jax.ShapeDtypeStruct((B, outdim_p), out_dtype),
        grid=grid,
        in_specs=[
            pl.BlockSpec((tb, indim_p), lambda i, h: (i, 0)),                      # x
            pl.BlockSpec((indim_p, th), lambda i, h: (0, h), pipeline_mode=resident),   # w1
            pl.BlockSpec((1, th), lambda i, h: (0, h), pipeline_mode=resident),         # b1
            pl.BlockSpec((th, outdim_p), lambda i, h: (h, 0), pipeline_mode=resident),  # w2
            pl.BlockSpec((1, outdim_p), lambda i, h: (0, 0),
                         pipeline_mode=pl.Buffered(1)),                                 # b2
        ],
        out_specs=pl.BlockSpec((tb, outdim_p), lambda i, h: (i, 0)),
        scratch_shapes=[pltpu.VMEM((tb, outdim_p), jnp.float32)],
        compiler_params=pltpu.CompilerParams(
            dimension_semantics=("parallel", "arbitrary"),
            vmem_limit_bytes=plan["vmem_limit"],
        ),
    )(x, w1_p, b1_p, w2_p, b2_p)

    if outdim_p != plan["outdim"]:
        out_p = out_p[:, :plan["outdim"]]
    return out_p


def sfr_model_forward(x, w1, b1, w2, b2, *, compute_dtype=jnp.bfloat16,
                      tb_max=512, hidden_tile=None):
    """x: [B, indim]; w1: [indim, hdim]; b1: [hdim]; w2: [hdim, outdim]; b2: [outdim].

    Default path uses bf16 MXU inputs with f32 accumulation (native fast path on
    v6e/v7x); pass compute_dtype=jnp.float32 for strict f32 parity with torch.
    """
    plan = make_plan(x.shape[1], w1.shape[1], w2.shape[1],
                     compute_dtype=compute_dtype, out_dtype=x.dtype,
                     tb_max=tb_max, hidden_tile=hidden_tile)
    params_p = prepare_params(w1, b1, w2, b2, plan)
    return mlp_forward(x, params_p, plan)


# --------------------------------------------------------------------------------------
# Reference / init / tests
# --------------------------------------------------------------------------------------
def init_params(key, indim, hdim, outdim, dtype=jnp.float32):
    """Mimics nn.Linear's uniform(-1/sqrt(fan_in), 1/sqrt(fan_in)); weights stored [in, out]."""
    k1, k2, k3, k4 = jax.random.split(key, 4)
    bound1 = 1.0 / (indim ** 0.5)
    bound2 = 1.0 / (hdim ** 0.5)
    w1 = jax.random.uniform(k1, (indim, hdim), dtype, -bound1, bound1)
    b1 = jax.random.uniform(k2, (hdim,), dtype, -bound1, bound1)
    w2 = jax.random.uniform(k3, (hdim, outdim), dtype, -bound2, bound2)
    b2 = jax.random.uniform(k4, (outdim,), dtype, -bound2, bound2)
    return w1, b1, w2, b2


def reference_forward(x, w1, b1, w2, b2):
    h = x @ w1 + b1
    h = jnp.where(h >= 0, h, NEG_SLOPE * h)
    return h @ w2 + b2


if __name__ == "__main__":
    key = jax.random.PRNGKey(0)
    kx1, kp1, kx2, kp2, kx3, kp3 = jax.random.split(key, 6)

    # 1) Small shape, strict f32 parity path (single grid step, resident weights).
    B1, I1, H1, O1 = 8, 32, 64, 16
    x1 = jax.random.normal(kx1, (B1, I1), jnp.float32)
    p1 = init_params(kp1, I1, H1, O1)
    out1 = jax.block_until_ready(sfr_model_forward(x1, *p1, compute_dtype=jnp.float32))
    ref1 = reference_forward(x1, *p1)
    assert out1.shape == (B1, O1)
    assert jnp.allclose(out1, ref1, atol=1e-5, rtol=1e-5), "f32 small-shape mismatch"

    # 2) Ragged batch (no batch padding), >=2 batch grid steps, forced hidden tiling
    #    (n_h = 3) to exercise the reduction/accumulator path, still f32.
    B2, I2, H2, O2 = 200, 96, 384, 48
    x2 = jax.random.normal(kx2, (B2, I2), jnp.float32)
    p2 = init_params(kp2, I2, H2, O2)
    out2 = jax.block_until_ready(
        sfr_model_forward(x2, *p2, compute_dtype=jnp.float32, hidden_tile=128))
    ref2 = reference_forward(x2, *p2)
    assert out2.shape == (B2, O2)
    assert jnp.allclose(out2, ref2, atol=5e-3, rtol=5e-3), "f32 tiled/ragged mismatch"

    # 3) Default fast path: bf16 MXU inputs + f32 accumulation (looser tolerance by design).
    B3, I3, H3, O3 = 64, 256, 256, 128
    x3 = jax.random.normal(kx3, (B3, I3), jnp.float32)
    p3 = init_params(kp3, I3, H3, O3)
    out3 = jax.block_until_ready(sfr_model_forward(x3, *p3))
    ref3 = reference_forward(x3, *p3)
    assert out3.shape == (B3, O3)
    assert jnp.allclose(out3, ref3, atol=1e-1, rtol=1e-1), "bf16 default path mismatch"

    print("KERNEL_OK")
</pallas_src>

<mosaic_0001>
module attributes {stable_mosaic.version = 11 : i64} {
  func.func @mlp_kernel(%arg0: i32, %arg1: i32, %arg2: memref<8x128xf32, #tpu.memory_space<vmem>>, %arg3: memref<128x128xf32, #tpu.memory_space<vmem>>, %arg4: memref<1x128xf32, #tpu.memory_space<vmem>>, %arg5: memref<128x128xf32, #tpu.memory_space<vmem>>, %arg6: memref<1x128xf32, #tpu.memory_space<vmem>>, %arg7: memref<8x128xf32, #tpu.memory_space<vmem>>, %arg8: memref<8x128xf32, #tpu.memory_space<vmem>>) attributes {dimension_semantics = [#tpu.dimension_semantics<parallel>, #tpu.dimension_semantics<arbitrary>], iteration_bounds = array<i64: 1, 1>, scalar_prefetch = 0 : i64, scratch_operands = 1 : i64, tpu.core_type = #tpu.core_type<tc>, window_params = [{transform_indices = @transform_0, window_bounds = array<i64: 8, 128>}, {pipeline_mode = #tpu.pipeline_mode<synchronous>, transform_indices = @transform_1, window_bounds = array<i64: 128, 128>}, {pipeline_mode = #tpu.pipeline_mode<synchronous>, transform_indices = @transform_2, window_bounds = array<i64: 1, 128>}, {pipeline_mode = #tpu.pipeline_mode<synchronous>, transform_indices = @transform_3, window_bounds = array<i64: 128, 128>}, {pipeline_mode = #tpu.pipeline_mode<synchronous>, transform_indices = @transform_4, window_bounds = array<i64: 1, 128>}, {transform_indices = @transform_5, window_bounds = array<i64: 8, 128>}]} {
    %c0_i32 = arith.constant 0 : i32
    %0 = arith.cmpi eq, %arg1, %c0_i32 : i32
    %1 = arith.extui %0 : i1 to i32
    %c0_i32_0 = arith.constant 0 : i32
    %2 = arith.cmpi ne, %1, %c0_i32_0 : i32
    scf.if %2 {
      %cst_17 = arith.constant 0.000000e+00 : f32
      %22 = vector.broadcast %cst_17 : f32 to vector<8x128xf32>
      %c0_18 = arith.constant 0 : index
      %c0_19 = arith.constant 0 : index
      %23 = vector.load %arg8[%c0_18, %c0_19] : memref<8x128xf32, #tpu.memory_space<vmem>>, vector<8x128xf32>
      tpu.vector_store %arg8[%c0_18, %c0_19], %22 {strides = array<i32>} : memref<8x128xf32, #tpu.memory_space<vmem>>, vector<8x128xf32>,
    } else {
    }
    %c0 = arith.constant 0 : index
    %c0_1 = arith.constant 0 : index
    %3 = vector.load %arg2[%c0, %c0_1] : memref<8x128xf32, #tpu.memory_space<vmem>>, vector<8x128xf32>
    %c0_2 = arith.constant 0 : index
    %c0_3 = arith.constant 0 : index
    %4 = vector.load %arg3[%c0_2, %c0_3] : memref<128x128xf32, #tpu.memory_space<vmem>>, vector<128x128xf32>
    %cst = arith.constant dense<0.000000e+00> : vector<8x128xf32>
    %5 = tpu.matmul %3, %4, %cst {dimension_numbers = #tpu.dot_dimension_numbers<[1], [0], [0], [1], [0, 0, 1, 1], [], []>} : vector<8x128xf32>, vector<128x128xf32>, vector<8x128xf32> -> vector<8x128xf32>
    %c0_4 = arith.constant 0 : index
    %c0_5 = arith.constant 0 : index
    %6 = vector.load %arg4[%c0_4, %c0_5] : memref<1x128xf32, #tpu.memory_space<vmem>>, vector<1x128xf32>
    %7 = vector.broadcast %6 : vector<1x128xf32> to vector<8x128xf32>
    %8 = arith.addf %5, %7 : vector<8x128xf32>
    %cst_6 = arith.constant 0.000000e+00 : f32
    %9 = vector.broadcast %cst_6 : f32 to vector<8x128xf32>
    %10 = arith.cmpf oge, %8, %9 : vector<8x128xf32>
    %cst_7 = arith.constant 0.00999999977 : f32
    %11 = vector.broadcast %cst_7 : f32 to vector<8x128xf32>
    %12 = arith.mulf %11, %8 : vector<8x128xf32>
    %13 = arith.select %10, %8, %12 : vector<8x128xi1>, vector<8x128xf32>
    %c0_8 = arith.constant 0 : index
    %c0_9 = arith.constant 0 : index
    %14 = vector.load %arg8[%c0_8, %c0_9] : memref<8x128xf32, #tpu.memory_space<vmem>>, vector<8x128xf32>
    %c0_10 = arith.constant 0 : index
    %c0_11 = arith.constant 0 : index
    %15 = vector.load %arg5[%c0_10, %c0_11] : memref<128x128xf32, #tpu.memory_space<vmem>>, vector<128x128xf32>
    %cst_12 = arith.constant dense<0.000000e+00> : vector<8x128xf32>
    %16 = tpu.matmul %13, %15, %cst_12 {dimension_numbers = #tpu.dot_dimension_numbers<[1], [0], [0], [1], [0, 0, 1, 1], [], []>} : vector<8x128xf32>, vector<128x128xf32>, vector<8x128xf32> -> vector<8x128xf32>
    %17 = arith.addf %14, %16 : vector<8x128xf32>
    %c0_13 = arith.constant 0 : index
    %c0_14 = arith.constant 0 : index
    %18 = vector.load %arg8[%c0_13, %c0_14] : memref<8x128xf32, #tpu.memory_space<vmem>>, vector<8x128xf32>
    tpu.vector_store %arg8[%c0_13, %c0_14], %17 {strides = array<i32>} : memref<8x128xf32, #tpu.memory_space<vmem>>, vector<8x128xf32>,
    %c0_i32_15 = arith.constant 0 : i32
    %19 = arith.cmpi eq, %arg1, %c0_i32_15 : i32
    %20 = arith.extui %19 : i1 to i32
    %c0_i32_16 = arith.constant 0 : i32
    %21 = arith.cmpi ne, %20, %c0_i32_16 : i32
    scf.if %21 {
      %c0_17 = arith.constant 0 : index
      %c0_18 = arith.constant 0 : index
      %22 = vector.load %arg8[%c0_17, %c0_18] : memref<8x128xf32, #tpu.memory_space<vmem>>, vector<8x128xf32>
      %c0_19 = arith.constant 0 : index
      %c0_20 = arith.constant 0 : index
      %23 = vector.load %arg6[%c0_19, %c0_20] : memref<1x128xf32, #tpu.memory_space<vmem>>, vector<1x128xf32>
      %24 = vector.broadcast %23 : vector<1x128xf32> to vector<8x128xf32>
      %25 = arith.addf %22, %24 : vector<8x128xf32>
      %c0_21 = arith.constant 0 : index
      %c0_22 = arith.constant 0 : index
      %26 = vector.load %arg7[%c0_21, %c0_22] : memref<8x128xf32, #tpu.memory_space<vmem>>, vector<8x128xf32>
      tpu.vector_store %arg7[%c0_21, %c0_22], %25 {strides = array<i32>} : memref<8x128xf32, #tpu.memory_space<vmem>>, vector<8x128xf32>,
    } else {
    }
    return
  }
  func.func @transform_0(%arg0: i32, %arg1: i32) -> (i32, i32) {
    %c0_i32 = arith.constant 0 : i32
    %c0_i32_0 = arith.constant 0 : i32
    return %arg0, %c0_i32 : i32, i32
  }
  func.func @transform_1(%arg0: i32, %arg1: i32) -> (i32, i32) {
    %c0_i32 = arith.constant 0 : i32
    %c0_i32_0 = arith.constant 0 : i32
    return %c0_i32, %arg1 : i32, i32
  }
  func.func @transform_2(%arg0: i32, %arg1: i32) -> (i32, i32) {
    %c0_i32 = arith.constant 0 : i32
    %c0_i32_0 = arith.constant 0 : i32
    return %c0_i32, %arg1 : i32, i32
  }
  func.func @transform_3(%arg0: i32, %arg1: i32) -> (i32, i32) {
    %c0_i32 = arith.constant 0 : i32
    %c0_i32_0 = arith.constant 0 : i32
    return %arg1, %c0_i32 : i32, i32
  }
  func.func @transform_4(%arg0: i32, %arg1: i32) -> (i32, i32) {
    %c0_i32 = arith.constant 0 : i32
    %c0_i32_0 = arith.constant 0 : i32
    %c0_i32_1 = arith.constant 0 : i32
    return %c0_i32, %c0_i32_0 : i32, i32
  }
  func.func @transform_5(%arg0: i32, %arg1: i32) -> (i32, i32) {
    %c0_i32 = arith.constant 0 : i32
    %c0_i32_0 = arith.constant 0 : i32
    return %arg0, %c0_i32 : i32, i32
  }
}

</mosaic_0001>

<llo_original>
// kernel: tpu_custom_call.1
$region0: #{tpu_custom_call.1}
  #allocation0 [shape = 'u32[]', space=smem, size = 0x4, offset = 0x4, fixed_abs, tag = 'smem constant byte address 0x4 - core index']
  #allocation1 [shape = 'u32[72,128]{1,0:T(1,128)}', space=vmem, size = 0x9000, scoped, tag = 'internal scratch']
  #allocation2 [shape = 'f32[8,128]{1,0:T(8,128)}', space=vmem, size = 0x1000, scoped, tag = 'scratch operand']
  %s0 = inlined_call_operand.hbm [shape: f32[8,128], index: 0, kind: input, shape index: {}]
  %s1 = inlined_call_operand.hbm [shape: f32[128,128], index: 1, kind: input, shape index: {}]
  %s2 = inlined_call_operand.vmem [shape: f32[1,128], index: 2, kind: input, shape index: {}]
  %s3 = inlined_call_operand.hbm [shape: f32[128,128], index: 3, kind: input, shape index: {}]
  %s4 = inlined_call_operand.vmem [shape: f32[1,128], index: 4, kind: input, shape index: {}]
  %s5 = inlined_call_operand.hbm [shape: f32[8,128], index: 5, kind: output, shape index: {}]
  %s6 = sld [smem:[#allocation0]]
  $region50: #{tpu_custom_call.1} parent=0
    _
  %s8 = ssub.s32 1, %s6
  %s9 = scalar_select 0, %s8, %s6
  $region1: #{tpu_custom_call.1} parent=0
    #allocation3 [shape = 'u8[4096]{0}', space=vmem, size = 0x1000, scoped, tag = 'input window, operand 0, single buffered']
    #allocation4 [shape = 's32[1]{0}', space=sflag, size = 0x4, scoped, tag = 'scoped memory for tpu_custom_call.1']
    #allocation5 [shape = 's32[1]{0}', space=sflag, size = 0x4, scoped, tag = 'scoped memory for tpu_custom_call.1']
    #allocation6 [shape = 'u8[65536]{0}', space=vmem, size = 0x10000, scoped, tag = 'input window, operand 1, single buffered']
    #allocation7 [shape = 's32[1]{0}', space=sflag, size = 0x4, scoped, tag = 'scoped memory for tpu_custom_call.1']
    #allocation8 [shape = 'u8[65536]{0}', space=vmem, size = 0x10000, scoped, tag = 'input window, operand 3, single buffered']
    #allocation9 [shape = 'u8[4096]{0}', space=vmem, size = 0x1000, scoped, tag = 'output window, operand 0, single buffered']
    %10 = vsyncpa [#allocation4], 0
    %11 = vsyncpa [#allocation7], 0
    %12 = vsyncpa [#allocation5], 0
    // Predicated region
    $region2: #{tpu_custom_call.1} parent=1 // pred_check
      _
    $region3: #{tpu_custom_call.1} parent=1 // pred_check_branch
      %14 = sbr.rel (0) target = $region5
    $region4: #{tpu_custom_call.1} parent=1 // pred_region
      %16 = vsyncadd [#allocation4], 0
      %s18 = sshll.u32 %s0, 4
      %s19 = int_to_ptr.hbm [resolvable:$true] %s18
      %s20 = sshll.u32 [#allocation3], 4
      %s21 = int_to_ptr.vmem [resolvable:$true] %s20
      %23 = dma.hbm_to_vmem [thread:$0]  %s19, 128, %s21, [#allocation4]
    $region5: #{tpu_custom_call.1} parent=1 // pred_fallthru
      _
    // Predicated region
    $region6: #{tpu_custom_call.1} parent=1 // pred_check
      _
    $region7: #{tpu_custom_call.1} parent=1 // pred_check_branch
      %25 = sbr.rel (0) target = $region9
    $region8: #{tpu_custom_call.1} parent=1 // pred_region
      %27 = vsyncadd [#allocation7], 0
      %s28 = sshll.u32 %s1, 4
      %s29 = int_to_ptr.hbm [resolvable:$true] %s28
      %s30 = sshll.u32 [#allocation6], 4
      %s31 = int_to_ptr.vmem [resolvable:$true] %s30
      %36 = dma.hbm_to_vmem [thread:$0]  %s29, 2048, %s31, [#allocation7], 128, 128, 8
    $region9: #{tpu_custom_call.1} parent=1 // pred_fallthru
      _
    // Predicated region
    $region10: #{tpu_custom_call.1} parent=1 // pred_check
      _
    $region11: #{tpu_custom_call.1} parent=1 // pred_check_branch
      %38 = sbr.rel (0) target = $region13
    $region12: #{tpu_custom_call.1} parent=1 // pred_region
      _
    $region13: #{tpu_custom_call.1} parent=1 // pred_fallthru
      _
    // Predicated region
    $region14: #{tpu_custom_call.1} parent=1 // pred_check
      _
    $region15: #{tpu_custom_call.1} parent=1 // pred_check_branch
      %40 = sbr.rel (0) target = $region17
    $region16: #{tpu_custom_call.1} parent=1 // pred_region
      %42 = vsyncadd [#allocation7], 0
      %s43 = sshll.u32 %s3, 4
      %s44 = int_to_ptr.hbm [resolvable:$true] %s43
      %s45 = sshll.u32 [#allocation8], 4
      %s46 = int_to_ptr.vmem [resolvable:$true] %s45
      %51 = dma.hbm_to_vmem [thread:$0]  %s44, 2048, %s46, [#allocation7], 128, 128, 8
    $region17: #{tpu_custom_call.1} parent=1 // pred_fallthru
      _
    // Predicated region
    $region18: #{tpu_custom_call.1} parent=1 // pred_check
      _
    $region19: #{tpu_custom_call.1} parent=1 // pred_check_branch
      %53 = sbr.rel (0) target = $region21
    $region20: #{tpu_custom_call.1} parent=1 // pred_region
      _
    $region21: #{tpu_custom_call.1} parent=1 // pred_fallthru
      _
    // Predicated region
    $region22: #{tpu_custom_call.1} parent=1 // pred_check
      _
    $region23: #{tpu_custom_call.1} parent=1 // pred_check_branch
      %55 = sbr.rel (0) target = $region25
    $region24: #{tpu_custom_call.1} parent=1 // pred_region
      %57 = dma.done [#allocation4], 128
    $region25: #{tpu_custom_call.1} parent=1 // pred_fallthru
      _
    // Predicated region
    $region26: #{tpu_custom_call.1} parent=1 // pred_check
      _
    $region27: #{tpu_custom_call.1} parent=1 // pred_check_branch
      %59 = sbr.rel (0) target = $region29
    $region28: #{tpu_custom_call.1} parent=1 // pred_region
      %61 = dma.done [#allocation7], 2048
    $region29: #{tpu_custom_call.1} parent=1 // pred_fallthru
      _
    // Predicated region
    $region30: #{tpu_custom_call.1} parent=1 // pred_check
      _
    $region31: #{tpu_custom_call.1} parent=1 // pred_check_branch
      %63 = sbr.rel (0) target = $region33
    $region32: #{tpu_custom_call.1} parent=1 // pred_region
      %65 = dma.done [#allocation7], 2048
    $region33: #{tpu_custom_call.1} parent=1 // pred_fallthru
      _
    %p66 = scmp.eq.s32.totalorder 0, 0
    // Predicated region
    $region34: #{tpu_custom_call.1} parent=1 // pred_check
      %p67 = pneg %p66
    $region35: #{tpu_custom_call.1} parent=1 // pred_check_branch
      %69 = sbr.rel (%p67) target = $region37
    $region36: #{tpu_custom_call.1} parent=1 // pred_region
      %70 = vst [vmem:[#allocation2] sm:$0xff] 0.0
    $region37: #{tpu_custom_call.1} parent=1 // pred_fallthru
      _
    %v71 = vld [vmem:[#allocation3] sm:$0xff]
    %v72 = vld [vmem:[#allocation6] sm:$0xff]
    %v73 = vld [vmem:[#allocation6 + $0x8] sm:$0xff]
    %v74 = vld [vmem:[#allocation6 + $0x10] sm:$0xff]
    %v75 = vld [vmem:[#allocation6 + $0x18] sm:$0xff]
    %v76 = vld [vmem:[#allocation6 + $0x20] sm:$0xff]
    %v77 = vld [vmem:[#allocation6 + $0x28] sm:$0xff]
    %v78 = vld [vmem:[#allocation6 + $0x30] sm:$0xff]
    %v79 = vld [vmem:[#allocation6 + $0x38] sm:$0xff]
    %v80 = vld [vmem:[#allocation6 + $0x40] sm:$0xff]
    %v81 = vld [vmem:[#allocation6 + $0x48] sm:$0xff]
    %v82 = vld [vmem:[#allocation6 + $0x50] sm:$0xff]
    %v83 = vld [vmem:[#allocation6 + $0x58] sm:$0xff]
    %v84 = vld [vmem:[#allocation6 + $0x60] sm:$0xff]
    %v85 = vld [vmem:[#allocation6 + $0x68] sm:$0xff]
    %v86 = vld [vmem:[#allocation6 + $0x70] sm:$0xff]
    %v87 = vld [vmem:[#allocation6 + $0x78] sm:$0xff]
    %v88 = vld [vmem:[%s2] sm:$0x1]
    %v90 = vperm.slane %v88, 0
    %92 = vmatpush.msra.mxu0 %v87
    %93 = vmatpush.msra.mxu0 %v86
    %94 = vmatpush.msra.mxu0 %v85
    %95 = vmatpush.msra.mxu0 %v84
    %96 = vmatpush.msra.mxu0 %v83
    %97 = vmatpush.msra.mxu0 %v82
    %98 = vmatpush.msra.mxu0 %v81
    %99 = vmatpush.msra.mxu0 %v80
    %100 = vmatpush.msra.mxu0 %v79
    %101 = vmatpush.msra.mxu0 %v78
    %102 = vmatpush.msra.mxu0 %v77
    %103 = vmatpush.msra.mxu0 %v76
    %104 = vmatpush.msra.mxu0 %v75
    %105 = vmatpush.msra.mxu0 %v74
    %106 = vmatpush.msra.mxu0 %v73
    %107 = vmatpush.msra.mxu0 %v72
    %108 = vmatmul.f32.gmra.mxu0 %v71
    %v109 = vpop.f32.mrf.mxu0
    %v110 = vadd.f32 %v90, %v109
    %111 = vdwg.mxu0
    %vm112 = vcmp.ge.f32.partialorder %v110, 0.0
    %v113 = vmul.f32 %v110, 0.01
    %v114 = vsel %vm112, %v110, %v113
    %v115 = vld [vmem:[#allocation2] sm:$0xff]
    %v116 = vld [vmem:[#allocation8] sm:$0xff]
    %v117 = vld [vmem:[#allocation8 + $0x8] sm:$0xff]
    %v118 = vld [vmem:[#allocation8 + $0x10] sm:$0xff]
    %v119 = vld [vmem:[#allocation8 + $0x18] sm:$0xff]
    %v120 = vld [vmem:[#allocation8 + $0x20] sm:$0xff]
    %v121 = vld [vmem:[#allocation8 + $0x28] sm:$0xff]
    %v122 = vld [vmem:[#allocation8 + $0x30] sm:$0xff]
    %v123 = vld [vmem:[#allocation8 + $0x38] sm:$0xff]
    %v124 = vld [vmem:[#allocation8 + $0x40] sm:$0xff]
    %v125 = vld [vmem:[#allocation8 + $0x48] sm:$0xff]
    %v126 = vld [vmem:[#allocation8 + $0x50] sm:$0xff]
    %v127 = vld [vmem:[#allocation8 + $0x58] sm:$0xff]
    %v128 = vld [vmem:[#allocation8 + $0x60] sm:$0xff]
    %v129 = vld [vmem:[#allocation8 + $0x68] sm:$0xff]
    %v130 = vld [vmem:[#allocation8 + $0x70] sm:$0xff]
    %v131 = vld [vmem:[#allocation8 + $0x78] sm:$0xff]
    %132 = vmatpush.msra.mxu0 %v131
    %133 = vmatpush.msra.mxu0 %v130
    %134 = vmatpush.msra.mxu0 %v129
    %135 = vmatpush.msra.mxu0 %v128
    %136 = vmatpush.msra.mxu0 %v127
    %137 = vmatpush.msra.mxu0 %v126
    %138 = vmatpush.msra.mxu0 %v125
    %139 = vmatpush.msra.mxu0 %v124
    %140 = vmatpush.msra.mxu0 %v123
    %141 = vmatpush.msra.mxu0 %v122
    %142 = vmatpush.msra.mxu0 %v121
    %143 = vmatpush.msra.mxu0 %v120
    %144 = vmatpush.msra.mxu0 %v119
    %145 = vmatpush.msra.mxu0 %v118
    %146 = vmatpush.msra.mxu0 %v117
    %147 = vmatpush.msra.mxu0 %v116
    %148 = vmatmul.f32.gmra.mxu0 %v114
    %v149 = vpop.f32.mrf.mxu0
    %v150 = vadd.f32 0.0, %v149
    %151 = vdwg.mxu0
    %v152 = vadd.f32 %v115, %v150
    %153 = vst [vmem:[#allocation2] sm:$0xff] %v152
    // Predicated region
    $region38: #{tpu_custom_call.1} parent=1 // pred_check
      %p154 = pneg %p66
    $region39: #{tpu_custom_call.1} parent=1 // pred_check_branch
      %156 = sbr.rel (%p154) target = $region41
    $region40: #{tpu_custom_call.1} parent=1 // pred_region
      %v157 = vld [vmem:[#allocation2] sm:$0xff]
      %v158 = vld [vmem:[%s4] sm:$0x1]
      %v160 = vperm.slane %v158, 0
      %v162 = vadd.f32 %v157, %v160
      %163 = vst [vmem:[#allocation9] sm:$0xff] %v162
    $region41: #{tpu_custom_call.1} parent=1 // pred_fallthru
      _
    // Predicated region
    $region42: #{tpu_custom_call.1} parent=1 // pred_check
      _
    $region43: #{tpu_custom_call.1} parent=1 // pred_check_branch
      %165 = sbr.rel (0) target = $region45
    $region44: #{tpu_custom_call.1} parent=1 // pred_region
      %167 = vsyncadd [#allocation5], 0
      %s169 = sshll.u32 [#allocation9], 4
      %s170 = int_to_ptr.vmem [resolvable:$true] %s169
      %s171 = sshll.u32 %s5, 4
      %s172 = int_to_ptr.hbm [resolvable:$true] %s171
      %174 = dma.vmem_to_hbm [thread:$0]  %s170, 128, %s172, [#allocation5]
    $region45: #{tpu_custom_call.1} parent=1 // pred_fallthru
      _
    // Predicated region
    $region46: #{tpu_custom_call.1} parent=1 // pred_check
      _
    $region47: #{tpu_custom_call.1} parent=1 // pred_check_branch
      %176 = sbr.rel (0) target = $region49
    $region48: #{tpu_custom_call.1} parent=1 // pred_region
      %178 = dma.done [#allocation5], 128
    $region49: #{tpu_custom_call.1} parent=1 // pred_fallthru
      _
    %179 = vsyncpa [#allocation4], 1
    %180 = vsyncpa [#allocation7], 1
    %181 = vsyncpa [#allocation5], 1

</llo_original>
